<compile_context>
chip_gen: v5e
topology: v5e:2x2
jax: 0.10.0
libtpu: 0.0.40
codegen_flags: <defaults>
</compile_context>

<pallas_src>
import functools

import jax
import jax.numpy as jnp
from jax.experimental import pallas as pl
from jax.experimental.pallas import tpu as pltpu


def _round_up(x, m):
    return ((x + m - 1) // m) * m


_TM_CANDIDATES = (512, 256, 128, 64, 32, 16, 8)
_MAX_FUSED_M = 512          # cap on h_fold * tm fed to one MXU call


def _band_dims(t, tm):
    w_pad = max(_round_up(t + tm, 128), 128)   # lane-aligned band width
    r_pad = (t - tm) + w_pad                   # rows of the zero-padded table (>= 2t)
    return w_pad, r_pad


def _footprint_bytes(t, d, tm, h_fold, in_isz, out_isz):
    """Conservative per-grid-step VMEM footprint (double buffers + intermediates)."""
    w_pad, r_pad = _band_dims(t, tm)
    q_blk = 2 * h_fold * tm * d * in_isz        # double-buffered q block
    e_blk = 2 * r_pad * d * in_isz              # resident padded table (x2 headroom)
    band = w_pad * d * in_isz                   # in-kernel band slice copy
    s_tmp = 2 * h_fold * tm * w_pad * 4         # f32 scores, pre + post roll
    o_blk = 2 * h_fold * tm * t * out_isz       # double-buffered output block
    return q_blk + e_blk + band + s_tmp + o_blk


def _choose_tiles(t, h, d, shared_heads, in_isz, out_isz, budget_bytes, max_row_tile):
    """Pick (tm, h_fold): row tile and number of heads folded into the matmul M dim."""
    if t % 8 != 0 or t <= 8:
        tm = t                                  # single full-height block (legal BlockSpec)
    else:
        tm = 8
        for cand in _TM_CANDIDATES:
            if max_row_tile is not None and cand > max_row_tile:
                continue
            if t % cand == 0 and _footprint_bytes(t, d, cand, 1, in_isz, out_isz) <= budget_bytes:
                tm = cand
                break
    h_fold = 1
    if shared_heads and tm % 8 == 0:            # reshape (h_fold, tm, d)->(h_fold*tm, d) needs 8-aligned tm
        for cand in range(h, 0, -1):
            if h % cand:
                continue
            if cand == 1 or (cand * tm <= _MAX_FUSED_M and
                             _footprint_bytes(t, d, tm, cand, in_isz, out_isz) <= budget_bytes):
                h_fold = cand
                break
    return tm, h_fold


def _rel_emb_fused_kernel(q_ref, e_ref, o_ref, *, tm, tokens, w_pad, h_fold,
                          sublane_aligned):
    # q_ref: (1, h_fold, tm, d)        query rows [ti*tm, (ti+1)*tm) for h_fold heads
    # e_ref: (1, r_pad, d)             zero-padded table; row k holds rel_emb[k - 1]
    # o_ref: (1, h_fold, tm, tokens)   block of the FINAL absolute-position output
    ti = pl.program_id(2)
    d = q_ref.shape[-1]

    # Rows [bstart, bstart + w_pad) of the padded table cover every relative index this
    # row block needs:  out[i, j] = q[i] . rel_emb[j - i + tokens - 1] for rows i here.
    bstart = tokens - tm * (ti + 1)                          # >= 0, multiple of tm
    if sublane_aligned:
        bstart = pl.multiple_of(bstart, 8)
    band = e_ref[0, pl.ds(bstart, w_pad), :]                 # (w_pad, d)

    if h_fold == 1:
        qm = q_ref[0, 0]                                     # (tm, d)
    else:
        # Fold heads into the matmul M dim (K = d is tiny; the band is shared by heads).
        qm = q_ref[0].reshape(h_fold * tm, d)                # (h_fold*tm, d)

    # s[m, c] = q_m . e_work[bstart + c]   (MXU, f32 accumulate)
    s = jax.lax.dot_general(qm, band, (((1,), (1,)), ((), ())),
                            preferred_element_type=jnp.float32)   # (h_fold*tm, w_pad)

    # Fused relative->absolute skew: out[i, j] = s[i, j - i + tm].
    # Per-row cyclic lane rotate by (w_pad - tm) + i; all kept indices stay un-wrapped.
    for hh in range(h_fold):
        sh = s[hh * tm:(hh + 1) * tm, :]                     # (tm, w_pad)
        sh = pltpu.roll(sh, w_pad - tm, axis=1, stride=1, stride_axis=0)
        o_ref[0, hh] = sh[:, :tokens].astype(o_ref.dtype)


def relative_embedding_forward(q, rel_pos_emb, shared_heads=True, *,
                               out_dtype=None, compute_dtype=None, max_row_tile=None):
    """q: [b, h, t, d] -> [b, h, t, t].  Matches rel_pos_emb_1d + relative_to_absolute.

    out_dtype:     dtype of the returned scores (default q.dtype).  bf16 halves the
                   dominant t*t HBM writeback (kernel is writeback-bound).
    compute_dtype: dtype fed to the MXU (default q.dtype); accumulation is always f32.
                   bf16 recommended on v5e.
    """
    b, h, t, d = q.shape
    r = 2 * t - 1

    if shared_heads:
        assert rel_pos_emb.ndim == 2 and rel_pos_emb.shape[0] >= r \
            and rel_pos_emb.shape[1] == d, rel_pos_emb.shape
        e_used = rel_pos_emb[:r, :]
    else:
        assert rel_pos_emb.ndim == 3 and rel_pos_emb.shape[0] == h \
            and rel_pos_emb.shape[1] >= r and rel_pos_emb.shape[2] == d, rel_pos_emb.shape
        e_used = rel_pos_emb[:, :r, :]

    compute_dtype = q.dtype if compute_dtype is None else jnp.dtype(compute_dtype)
    out_dtype = q.dtype if out_dtype is None else jnp.dtype(out_dtype)
    q_in = q.astype(compute_dtype)
    e_used = e_used.astype(compute_dtype)

    in_isz = jnp.dtype(compute_dtype).itemsize
    out_isz = jnp.dtype(out_dtype).itemsize

    # ---- per-chip VMEM budget and tile selection ---------------------------------
    try:
        vmem_phys = int(pltpu.get_tpu_info().vmem_capacity_bytes)
    except Exception:
        vmem_phys = 64 * 1024 * 1024             # conservative (v7x-sized) fallback
    budget = vmem_phys // 4

    tm, h_fold = _choose_tiles(t, h, d, shared_heads, in_isz, out_isz, budget, max_row_tile)
    n_row_blocks = t // tm
    n_head_groups = h // h_fold
    w_pad, r_pad = _band_dims(t, tm)
    footprint = _footprint_bytes(t, d, tm, h_fold, in_isz, out_isz)
    vmem_limit = int(min(0.9 * vmem_phys, max(4 * footprint, 16 * 1024 * 1024)))

    # One zero row in front (row k of e_work holds rel_emb[k-1]); zeros at the back keep
    # the per-block band slice in bounds and lane/sublane aligned.
    if shared_heads:
        e_work = jnp.pad(e_used, ((1, r_pad - r - 1), (0, 0)))[None]      # (1, r_pad, d)
        e_index_map = lambda bi, gi, ti: (0, 0, 0)                        # resident table
    else:
        e_work = jnp.pad(e_used, ((0, 0), (1, r_pad - r - 1), (0, 0)))    # (h, r_pad, d)
        e_index_map = lambda bi, gi, ti: (gi, 0, 0)

    kernel = functools.partial(
        _rel_emb_fused_kernel, tm=tm, tokens=t, w_pad=w_pad, h_fold=h_fold,
        sublane_aligned=(tm % 8 == 0 and t % 8 == 0))

    cost = pl.CostEstimate(
        flops=2 * b * h * t * w_pad * d,
        transcendentals=0,
        bytes_accessed=(q_in.size + e_work.size) * in_isz + b * h * t * t * out_isz)

    return pl.pallas_call(
        kernel,
        out_shape=jax.ShapeDtypeStruct((b, h, t, t), out_dtype),
        grid=(b, n_head_groups, n_row_blocks),
        in_specs=[
            pl.BlockSpec((1, h_fold, tm, d), lambda bi, gi, ti: (bi, gi, ti, 0)),
            pl.BlockSpec((1, r_pad, d), e_index_map),
        ],
        out_specs=pl.BlockSpec((1, h_fold, tm, t), lambda bi, gi, ti: (bi, gi, ti, 0)),
        compiler_params=pltpu.CompilerParams(
            dimension_semantics=("parallel", "parallel", "parallel"),
            vmem_limit_bytes=vmem_limit),
        cost_estimate=cost,
    )(q_in, e_work)


# --------------------------- pure-JAX reference (for tests) ---------------------------
def relative_to_absolute_ref(x):
    b, h, l, _ = x.shape
    x = jnp.concatenate([x, jnp.zeros((b, h, l, 1), x.dtype)], axis=3)
    flat_x = x.reshape(b, h, l * 2 * l)
    flat_x_padded = jnp.concatenate([flat_x, jnp.zeros((b, h, l - 1), x.dtype)], axis=2)
    final_x = flat_x_padded.reshape(b, h, l + 1, 2 * l - 1)
    return final_x[:, :, :l, l - 1:]


def _ref_forward(q, rel_emb, shared_heads):
    eq = 'bhtd,rd->bhtr' if shared_heads else 'bhtd,hrd->bhtr'
    rel = jnp.einsum(eq, q, rel_emb, precision=jax.lax.Precision.HIGHEST)
    return relative_to_absolute_ref(rel)


if __name__ == "__main__":
    b, heads, tokens, dim_head = 2, 4, 8, 32

    key = jax.random.PRNGKey(0)
    kq, ke, keh = jax.random.split(key, 3)

    q = jax.random.normal(kq, (b, heads, tokens, dim_head), dtype=jnp.float32)
    scale = dim_head ** (-0.5)

    # 1) Shared-heads path (PyTorch module default), exact f32 semantics, heads folded.
    rel_pos_emb = jax.random.normal(ke, (2 * tokens - 1, dim_head), jnp.float32) * scale
    out = jax.block_until_ready(relative_embedding_forward(q, rel_pos_emb, shared_heads=True))
    ref = _ref_forward(q, rel_pos_emb, True)
    assert out.shape == (b, heads, tokens, tokens), out.shape
    assert jnp.allclose(out, ref, atol=1e-5, rtol=1e-5), float(jnp.max(jnp.abs(out - ref)))

    # 2) Per-head table path (shared_heads=False).
    rel_pos_emb_h = (jax.random.normal(keh, (heads, 2 * tokens - 1, dim_head), jnp.float32)
                     * scale)
    out_h = jax.block_until_ready(
        relative_embedding_forward(q, rel_pos_emb_h, shared_heads=False))
    ref_h = _ref_forward(q, rel_pos_emb_h, False)
    assert jnp.allclose(out_h, ref_h, atol=1e-5, rtol=1e-5), \
        float(jnp.max(jnp.abs(out_h - ref_h)))

    # 3) Multi-row-block banded path (bstart > 0) with head folding — previously untested.
    t2, h2 = 64, 2
    q2 = jax.random.normal(jax.random.PRNGKey(1), (1, h2, t2, dim_head), jnp.float32)
    rel2 = jax.random.normal(jax.random.PRNGKey(2), (2 * t2 - 1, dim_head), jnp.float32) * scale
    out2 = jax.block_until_ready(
        relative_embedding_forward(q2, rel2, shared_heads=True, max_row_tile=16))
    ref2 = _ref_forward(q2, rel2, True)
    assert out2.shape == (1, h2, t2, t2), out2.shape
    assert jnp.allclose(out2, ref2, atol=1e-5, rtol=1e-5), \
        float(jnp.max(jnp.abs(out2 - ref2)))

    # 4) Low-precision fast path: bf16 MXU inputs + bf16 writeback (f32 accumulation).
    out_bf = jax.block_until_ready(
        relative_embedding_forward(q, rel_pos_emb, shared_heads=True,
                                   out_dtype=jnp.bfloat16, compute_dtype=jnp.bfloat16))
    assert out_bf.dtype == jnp.bfloat16
    assert jnp.allclose(out_bf.astype(jnp.float32), ref, atol=1e-1, rtol=1e-1), \
        float(jnp.max(jnp.abs(out_bf.astype(jnp.float32) - ref)))

    print("KERNEL_OK")
</pallas_src>

<mosaic_0001>
module attributes {stable_mosaic.version = 11 : i64} {
  func.func @_rel_emb_fused_kernel(%arg0: i32, %arg1: i32, %arg2: i32, %arg3: memref<1x4x8x32xf32, #tpu.memory_space<vmem>>, %arg4: memref<1x128x32xf32, #tpu.memory_space<vmem>>, %arg5: memref<1x4x8x8xf32, #tpu.memory_space<vmem>>) attributes {dimension_semantics = [#tpu.dimension_semantics<parallel>, #tpu.dimension_semantics<parallel>, #tpu.dimension_semantics<parallel>], iteration_bounds = array<i64: 2, 1, 1>, scalar_prefetch = 0 : i64, scratch_operands = 0 : i64, tpu.core_type = #tpu.core_type<tc>, window_params = [{transform_indices = @transform_0, window_bounds = array<i64: 1, 4, 8, 32>}, {pipeline_mode = #tpu.pipeline_mode<synchronous>, transform_indices = @transform_1, window_bounds = array<i64: 1, 128, 32>}, {transform_indices = @transform_2, window_bounds = array<i64: 1, 4, 8, 8>}]} {
    %c1_i32 = arith.constant 1 : i32
    %0 = arith.addi %arg2, %c1_i32 : i32
    %c8_i32 = arith.constant 8 : i32
    %1 = arith.muli %c8_i32, %0 : i32
    %c8_i32_0 = arith.constant 8 : i32
    %2 = arith.subi %c8_i32_0, %1 : i32
    %3 = tpu.assume_multiple %2, 8 : i32
    %c0 = arith.constant 0 : index
    %4 = arith.index_cast %3 : i32 to index
    %c0_1 = arith.constant 0 : index
    %5 = vector.load %arg4[%c0, %4, %c0_1] : memref<1x128x32xf32, #tpu.memory_space<vmem>>, vector<1x128x32xf32>
    %6 = vector.shape_cast %5 : vector<1x128x32xf32> to vector<128x32xf32>
    %c0_2 = arith.constant 0 : index
    %c0_3 = arith.constant 0 : index
    %c0_4 = arith.constant 0 : index
    %c0_5 = arith.constant 0 : index
    %7 = vector.load %arg3[%c0_2, %c0_3, %c0_4, %c0_5] : memref<1x4x8x32xf32, #tpu.memory_space<vmem>>, vector<1x4x8x32xf32>
    %8 = vector.shape_cast %7 : vector<1x4x8x32xf32> to vector<4x8x32xf32>
    %9 = vector.shape_cast %8 : vector<4x8x32xf32> to vector<32x32xf32>
    %cst = arith.constant dense<0.000000e+00> : vector<32x128xf32>
    %10 = tpu.matmul %9, %6, %cst {dimension_numbers = #tpu.dot_dimension_numbers<[1], [1], [0], [0], [0, 0, 1, 0], [], []>} : vector<32x32xf32>, vector<128x32xf32>, vector<32x128xf32> -> vector<32x128xf32>
    %11 = vector.extract_strided_slice %10 {offsets = [0, 0], sizes = [8, 128], strides = [1, 1]} : vector<32x128xf32> to vector<8x128xf32>
    %c120_i32 = arith.constant 120 : i32
    %12 = tpu.dynamic_rotate %11 by %c120_i32 dim 1 {stride = 1 : si32, stride_dimension = 0 : si32} : vector<8x128xf32>, i32 -> vector<8x128xf32>
    %13 = vector.extract_strided_slice %12 {offsets = [0, 0], sizes = [8, 8], strides = [1, 1]} : vector<8x128xf32> to vector<8x8xf32>
    %c0_6 = arith.constant 0 : index
    %c0_7 = arith.constant 0 : index
    %c0_8 = arith.constant 0 : index
    %c0_9 = arith.constant 0 : index
    %14 = vector.load %arg5[%c0_6, %c0_7, %c0_8, %c0_9] : memref<1x4x8x8xf32, #tpu.memory_space<vmem>>, vector<1x1x8x8xf32>
    %15 = vector.shape_cast %14 : vector<1x1x8x8xf32> to vector<8x8xf32>
    %16 = vector.shape_cast %13 : vector<8x8xf32> to vector<1x1x8x8xf32>
    tpu.vector_store %arg5[%c0_6, %c0_7, %c0_8, %c0_9], %16 {strides = array<i32>} : memref<1x4x8x8xf32, #tpu.memory_space<vmem>>, vector<1x1x8x8xf32>,
    %17 = vector.extract_strided_slice %10 {offsets = [8, 0], sizes = [8, 128], strides = [1, 1]} : vector<32x128xf32> to vector<8x128xf32>
    %c120_i32_10 = arith.constant 120 : i32
    %18 = tpu.dynamic_rotate %17 by %c120_i32_10 dim 1 {stride = 1 : si32, stride_dimension = 0 : si32} : vector<8x128xf32>, i32 -> vector<8x128xf32>
    %19 = vector.extract_strided_slice %18 {offsets = [0, 0], sizes = [8, 8], strides = [1, 1]} : vector<8x128xf32> to vector<8x8xf32>
    %c0_11 = arith.constant 0 : index
    %c1 = arith.constant 1 : index
    %c0_12 = arith.constant 0 : index
    %c0_13 = arith.constant 0 : index
    %20 = vector.load %arg5[%c0_11, %c1, %c0_12, %c0_13] : memref<1x4x8x8xf32, #tpu.memory_space<vmem>>, vector<1x1x8x8xf32>
    %21 = vector.shape_cast %20 : vector<1x1x8x8xf32> to vector<8x8xf32>
    %22 = vector.shape_cast %19 : vector<8x8xf32> to vector<1x1x8x8xf32>
    tpu.vector_store %arg5[%c0_11, %c1, %c0_12, %c0_13], %22 {strides = array<i32>} : memref<1x4x8x8xf32, #tpu.memory_space<vmem>>, vector<1x1x8x8xf32>,
    %23 = vector.extract_strided_slice %10 {offsets = [16, 0], sizes = [8, 128], strides = [1, 1]} : vector<32x128xf32> to vector<8x128xf32>
    %c120_i32_14 = arith.constant 120 : i32
    %24 = tpu.dynamic_rotate %23 by %c120_i32_14 dim 1 {stride = 1 : si32, stride_dimension = 0 : si32} : vector<8x128xf32>, i32 -> vector<8x128xf32>
    %25 = vector.extract_strided_slice %24 {offsets = [0, 0], sizes = [8, 8], strides = [1, 1]} : vector<8x128xf32> to vector<8x8xf32>
    %c0_15 = arith.constant 0 : index
    %c2 = arith.constant 2 : index
    %c0_16 = arith.constant 0 : index
    %c0_17 = arith.constant 0 : index
    %26 = vector.load %arg5[%c0_15, %c2, %c0_16, %c0_17] : memref<1x4x8x8xf32, #tpu.memory_space<vmem>>, vector<1x1x8x8xf32>
    %27 = vector.shape_cast %26 : vector<1x1x8x8xf32> to vector<8x8xf32>
    %28 = vector.shape_cast %25 : vector<8x8xf32> to vector<1x1x8x8xf32>
    tpu.vector_store %arg5[%c0_15, %c2, %c0_16, %c0_17], %28 {strides = array<i32>} : memref<1x4x8x8xf32, #tpu.memory_space<vmem>>, vector<1x1x8x8xf32>,
    %29 = vector.extract_strided_slice %10 {offsets = [24, 0], sizes = [8, 128], strides = [1, 1]} : vector<32x128xf32> to vector<8x128xf32>
    %c120_i32_18 = arith.constant 120 : i32
    %30 = tpu.dynamic_rotate %29 by %c120_i32_18 dim 1 {stride = 1 : si32, stride_dimension = 0 : si32} : vector<8x128xf32>, i32 -> vector<8x128xf32>
    %31 = vector.extract_strided_slice %30 {offsets = [0, 0], sizes = [8, 8], strides = [1, 1]} : vector<8x128xf32> to vector<8x8xf32>
    %c0_19 = arith.constant 0 : index
    %c3 = arith.constant 3 : index
    %c0_20 = arith.constant 0 : index
    %c0_21 = arith.constant 0 : index
    %32 = vector.load %arg5[%c0_19, %c3, %c0_20, %c0_21] : memref<1x4x8x8xf32, #tpu.memory_space<vmem>>, vector<1x1x8x8xf32>
    %33 = vector.shape_cast %32 : vector<1x1x8x8xf32> to vector<8x8xf32>
    %34 = vector.shape_cast %31 : vector<8x8xf32> to vector<1x1x8x8xf32>
    tpu.vector_store %arg5[%c0_19, %c3, %c0_20, %c0_21], %34 {strides = array<i32>} : memref<1x4x8x8xf32, #tpu.memory_space<vmem>>, vector<1x1x8x8xf32>,
    return
  }
  func.func @transform_0(%arg0: i32, %arg1: i32, %arg2: i32) -> (i32, i32, i32, i32) {
    %c0_i32 = arith.constant 0 : i32
    %c0_i32_0 = arith.constant 0 : i32
    return %arg0, %arg1, %arg2, %c0_i32 : i32, i32, i32, i32
  }
  func.func @transform_1(%arg0: i32, %arg1: i32, %arg2: i32) -> (i32, i32, i32) {
    %c0_i32 = arith.constant 0 : i32
    %c0_i32_0 = arith.constant 0 : i32
    %c0_i32_1 = arith.constant 0 : i32
    %c0_i32_2 = arith.constant 0 : i32
    return %c0_i32, %c0_i32_0, %c0_i32_1 : i32, i32, i32
  }
  func.func @transform_2(%arg0: i32, %arg1: i32, %arg2: i32) -> (i32, i32, i32, i32) {
    %c0_i32 = arith.constant 0 : i32
    %c0_i32_0 = arith.constant 0 : i32
    return %arg0, %arg1, %arg2, %c0_i32 : i32, i32, i32, i32
  }
}

</mosaic_0001>

<llo_original>
// kernel: tpu_custom_call.1
$region0: #{tpu_custom_call.1}
  #allocation0 [shape = 'u32[]', space=smem, size = 0x4, offset = 0x4, fixed_abs, tag = 'smem constant byte address 0x4 - core index']
  #allocation1 [shape = 'u32[72,128]{1,0:T(1,128)}', space=vmem, size = 0x9000, scoped, tag = 'internal scratch']
  %s0 = inlined_call_operand.vmem [shape: f32[2,4,8,32], index: 0, kind: input, shape index: {}]
  %s1 = inlined_call_operand.vmem [shape: f32[1,128,32], index: 1, kind: input, shape index: {}]
  %s2 = inlined_call_operand.hbm [shape: f32[2,4,8,8], index: 2, kind: output, shape index: {}]
  %s3 = sld [smem:[#allocation0]]
  $region41: #{tpu_custom_call.1} parent=0
    _
  %s5 = ssub.s32 1, %s3
  %s6 = scalar_select 0, %s5, %s3
  $region1: #{tpu_custom_call.1} parent=0
    #allocation2 [shape = 'u8[32768]{0}', space=vmem, size = 0x8000, scoped, tag = 'output window, operand 0']
    #allocation3 [shape = 's32[2]{0}', space=sflag, size = 0x8, scoped, tag = 'scoped memory for tpu_custom_call.1']
    %7 = vsyncpa [#allocation3], 0
    %s8 = scalar_lea.sflag [#allocation3], 1
    %9 = vsyncpa %s8, 0
    loop: start=0, step=1, limit=4
    $region2: #{tpu_custom_call.1} parent=1 // loop_pre_header
      _
    $region3: #{tpu_custom_call.1} parent=1 // loop_header
      %s11 = sphi 0, %s15
      %p12 = scmp.ge.s32.totalorder %s11, 4
      %s18 = sphi 0, %s37
      %s19 = sphi 0, %s33
      %s20 = sphi 0, %s29
      %s21 = sphi 0, %s18
      %s22 = sphi 0, %s19
      %s23 = sphi 0, %s20
      %s24 = sphi 0, %s21
      %s25 = sphi 0, %s22
      %s26 = sphi 0, %s23
      %s44 = sphi 0, %s46
      %s47 = sphi 0, %s44
      %s48 = sphi 0, %s47
      %s64 = sphi 0, %s48
      %s68 = sphi 0, %s68
      %s70 = sphi 0, %s68
      %s71 = sphi 0, %s70
      %s85 = sphi 0, %s71
      %s95 = sphi 0, %s97
      %s98 = sphi 0, %s95
      %s99 = sphi 0, %s98
      %s115 = sphi 0, %s99
    $region4: #{tpu_custom_call.1} parent=1 // loop_header_branch
      %14 = sbr.rel (%p12) target = $region8
    $region5: #{tpu_custom_call.1} parent=1 // loop_body
      %s16 = ssub.s32 %s11, 1
      %s17 = ssub.s32 %s11, 2
      %s27 = sadd.s32 1, %s20
      %p28 = scmp.ge.s32.totalorder %s27, 1
      %s29 = scalar_select %p28, 0, %s27
      %s30 = sadd.s32 1, %s19
      %s31 = scalar_select %p28, %s30, %s19
      %p32 = scmp.ge.s32.totalorder %s31, 1
      %s33 = scalar_select %p32, 0, %s31
      %s34 = sadd.s32 1, %s18
      %s35 = scalar_select %p32, %s34, %s18
      %p36 = scmp.ge.s32.totalorder %s35, 2
      %s37 = scalar_select %p36, 0, %s35
      %s38 = ssub.s32 %s18, %s37
      %s39 = ssub.s32 %s19, %s33
      %s40 = sor.u32 %s38, %s39
      %s41 = ssub.s32 %s20, %s29
      %s42 = sor.u32 %s40, %s41
      %p43 = scmp.eq.s32.totalorder %s42, 0
      %s45 = sadd.s32 %s44, 1
      %s46 = scalar_select %p43, %s44, %s45
      %p49 = pneg %p43
      %p50 = scmp.eq.s32.totalorder %s11, 1
      %p51 = por %p49, %p50
      %p52 = scmp.ne.s32.totalorder %s44, %s47
      %p53 = scmp.eq.s32.totalorder %s11, 0
      %p54 = por %p52, %p53
      %p55 = scmp.ne.s32.totalorder %s44, %s47
      %p56 = scmp.eq.s32.totalorder %s16, 1
      %p57 = por %p55, %p56
      %p58 = scmp.ne.s32.totalorder %s47, %s48
      %p59 = scmp.eq.s32.totalorder %s16, 0
      %p60 = por %p58, %p59
      %p61 = scmp.ne.s32.totalorder %s47, %s48
      %p62 = scmp.eq.s32.totalorder %s17, 1
      %p63 = por %p61, %p62
      %p65 = scmp.ne.s32.totalorder %s48, %s64
      %p66 = scmp.eq.s32.totalorder %s17, 0
      %p67 = por %p65, %p66
      %s69 = sadd.s32 %s68, 1
      %p72 = scmp.eq.s32.totalorder %s11, 1
      %p73 = scmp.ne.s32.totalorder %s68, %s70
      %p74 = scmp.eq.s32.totalorder %s11, 0
      %p75 = por %p73, %p74
      %p76 = scmp.ne.s32.totalorder %s68, %s70
      %p77 = scmp.eq.s32.totalorder %s16, 1
      %p78 = por %p76, %p77
      %p79 = scmp.ne.s32.totalorder %s70, %s71
      %p80 = scmp.eq.s32.totalorder %s16, 0
      %p81 = por %p79, %p80
      %p82 = scmp.ne.s32.totalorder %s70, %s71
      %p83 = scmp.eq.s32.totalorder %s17, 1
      %p84 = por %p82, %p83
      %p86 = scmp.ne.s32.totalorder %s71, %s85
      %p87 = scmp.eq.s32.totalorder %s17, 0
      %p88 = por %p86, %p87
      %s89 = ssub.s32 %s18, %s37
      %s90 = ssub.s32 %s19, %s33
      %s91 = sor.u32 %s89, %s90
      %s92 = ssub.s32 %s20, %s29
      %s93 = sor.u32 %s91, %s92
      %p94 = scmp.eq.s32.totalorder %s93, 0
      %s96 = sadd.s32 %s95, 1
      %s97 = scalar_select %p94, %s95, %s96
      %p100 = pneg %p94
      %p101 = scmp.eq.s32.totalorder %s11, 1
      %p102 = por %p100, %p101
      %p103 = scmp.ne.s32.totalorder %s95, %s98
      %p104 = scmp.eq.s32.totalorder %s11, 0
      %p105 = por %p103, %p104
      %p106 = scmp.ne.s32.totalorder %s95, %s98
      %p107 = scmp.eq.s32.totalorder %s16, 1
      %p108 = por %p106, %p107
      %p109 = scmp.ne.s32.totalorder %s98, %s99
      %p110 = scmp.eq.s32.totalorder %s16, 0
      %p111 = por %p109, %p110
      %p112 = scmp.ne.s32.totalorder %s98, %s99
      %p113 = scmp.eq.s32.totalorder %s17, 1
      %p114 = por %p112, %p113
      %p116 = scmp.ne.s32.totalorder %s99, %s115
      %p117 = scmp.eq.s32.totalorder %s17, 0
      %p118 = por %p116, %p117
      %p119 = scmp.le.s32.totalorder 1, %s11
      %p120 = scmp.lt.s32.totalorder %s11, 3
      %p121 = pnand %p119, %p120
      %p122 = pneg %p121
      // Predicated region
      $region9: #{tpu_custom_call.1} parent=5 // pred_check
        _
      $region10: #{tpu_custom_call.1} parent=5 // pred_check_branch
        %124 = sbr.rel (%p121) target = $region12
      $region11: #{tpu_custom_call.1} parent=5 // pred_region
        %s125 = ssub.s32 %s11, 1
        // Predicated region
        $region13: #{tpu_custom_call.1} parent=11 // pred_check
          %p126 = pneg %p81
        $region14: #{tpu_custom_call.1} parent=11 // pred_check_branch
          %128 = sbr.rel (%p126) target = $region16
        $region15: #{tpu_custom_call.1} parent=11 // pred_region
          _
        $region16: #{tpu_custom_call.1} parent=11 // pred_fallthru
          _
      $region12: #{tpu_custom_call.1} parent=5 // pred_fallthru
        _
      %p129 = scmp.lt.s32.totalorder %s11, 2
      // Predicated region
      $region17: #{tpu_custom_call.1} parent=5 // pred_check
        %p130 = pneg %p129
      $region18: #{tpu_custom_call.1} parent=5 // pred_check_branch
        %132 = sbr.rel (%p130) target = $region20
      $region19: #{tpu_custom_call.1} parent=5 // pred_region
        // Predicated region
        $region21: #{tpu_custom_call.1} parent=19 // pred_check
          %p133 = pneg %p54
        $region22: #{tpu_custom_call.1} parent=19 // pred_check_branch
          %135 = sbr.rel (%p133) target = $region24
        $region23: #{tpu_custom_call.1} parent=19 // pred_region
          %s136 = smul.u32 4, %s19
          %p137 = scmp.lt.s32.totalorder %s18, 1
          %s138 = scalar_select %p137, %s18, 1
          %p139 = scmp.lt.s32.totalorder %s136, 3
          %s140 = scalar_select %p139, %s136, 3
          %p141 = scmp.lt.s32.totalorder %s20, 0
          %s142 = scalar_select %p141, %s20, 0
          %s143 = sadd.s32 %s142, %s140
          %s144 = smul.addr %s138, 4
          %s145 = sadd.s32 %s143, %s144
          %s146 = smul.addr %s145, 8
          %s147 = scalar_lea.vmem %s0, %s146
          %s148 = smul.u32 4, %s19
        $region24: #{tpu_custom_call.1} parent=19 // pred_fallthru
          _
      $region20: #{tpu_custom_call.1} parent=5 // pred_fallthru
        _
      %p149 = scmp.le.s32.totalorder 1, %s11
      %p150 = scmp.lt.s32.totalorder %s11, 3
      %p151 = pnand %p149, %p150
      %p152 = pneg %p151
      // Predicated region
      $region25: #{tpu_custom_call.1} parent=5 // pred_check
        _
      $region26: #{tpu_custom_call.1} parent=5 // pred_check_branch
        %154 = sbr.rel (%p151) target = $region28
      $region27: #{tpu_custom_call.1} parent=5 // pred_region
        %s155 = ssub.s32 %s11, 1
        %s156 = smul.u32 4, %s22
        %p157 = scmp.lt.s32.totalorder %s21, 1
        %s158 = scalar_select %p157, %s21, 1
        %p159 = scmp.lt.s32.totalorder %s156, 3
        %s160 = scalar_select %p159, %s156, 3
        %p161 = scmp.lt.s32.totalorder %s23, 0
        %s162 = scalar_select %p161, %s23, 0
        %s163 = sadd.s32 %s162, %s160
        %s164 = smul.addr %s158, 4
        %s165 = sadd.s32 %s163, %s164
        %s166 = smul.addr %s165, 8
        %s167 = scalar_lea.vmem %s0, %s166
        %p168 = pneg %p60
        %p169 = pneg %p57
        %p170 = pneg %p81
        %p171 = pneg %p78
        %p172 = pneg %p111
        %p173 = pneg %p108
        %s174 = sand.u32 %s98, 1
        %s175 = scalar_lea.sflag [#allocation3], %s174
        %s176 = sand.u32 %s98, 1
        %s177 = smul.addr %s176, 32
        %s178 = scalar_lea.vmem [#allocation2], %s177
        %s179 = smul.u32 4, %s22
        %p180 = scmp.lt.s32.totalorder %s21, 1
        %s181 = scalar_select %p180, %s21, 1
        %p182 = scmp.lt.s32.totalorder %s179, 3
        %s183 = scalar_select %p182, %s179, 3
        %p184 = scmp.lt.s32.totalorder %s23, 0
        %s185 = scalar_select %p184, %s23, 0
        %s186 = sadd.s32 %s185, %s183
        %s187 = smul.addr %s181, 4
        %s188 = sadd.s32 %s186, %s187
        %s189 = smul.addr %s188, 8
        %s190 = scalar_lea.vmem %s0, %s189
        %s191 = smul.u32 4, %s22
        %s192 = smul.u32 4, %s22
        %s193 = sadd.s32 %s23, 1
        %s194 = smul.u32 %s193, 8
        %s195 = ssub.s32 8, %s194
        %s196 = scalar_lea.vmem %s1, %s195
        %v197 = vld [vmem:[%s196] sm:$0xff]
        %v198 = vld [vmem:[%s196 + $0x8] sm:$0xff]
        %v199 = vld [vmem:[%s196 + $0x10] sm:$0xff]
        %v200 = vld [vmem:[%s196 + $0x18] sm:$0xff]
        %v201 = vld [vmem:[%s196 + $0x20] sm:$0xff]
        %v202 = vld [vmem:[%s196 + $0x28] sm:$0xff]
        %v203 = vld [vmem:[%s196 + $0x30] sm:$0xff]
        %v204 = vld [vmem:[%s196 + $0x38] sm:$0xff]
        %v205 = vld [vmem:[%s196 + $0x40] sm:$0xff]
        %v206 = vld [vmem:[%s196 + $0x48] sm:$0xff]
        %v207 = vld [vmem:[%s196 + $0x50] sm:$0xff]
        %v208 = vld [vmem:[%s196 + $0x58] sm:$0xff]
        %v209 = vld [vmem:[%s196 + $0x60] sm:$0xff]
        %v210 = vld [vmem:[%s196 + $0x68] sm:$0xff]
        %v211 = vld [vmem:[%s196 + $0x70] sm:$0xff]
        %v212 = vld [vmem:[%s196 + $0x78] sm:$0xff]
        %v213 = vld [vmem:[%s190] sm:$0xff]
        %v214 = vld [vmem:[%s190 + $0x8] sm:$0xff]
        %v215 = vld [vmem:[%s190 + $0x10] sm:$0xff]
        %v216 = vld [vmem:[%s190 + $0x18] sm:$0xff]
        %vm217 = vcmask 261120
        %v219 = vsel %vm217, %v213, 0
        %v222 = vsel %vm217, %v214, 0
        %v225 = vsel %vm217, %v215, 0
        %v228 = vsel %vm217, %v216, 0
        %v231 = vsel %vm217, %v197, 0
        %v234 = vsel %vm217, %v198, 0
        %v237 = vsel %vm217, %v199, 0
        %v240 = vsel %vm217, %v200, 0
        %v243 = vsel %vm217, %v201, 0
        %v246 = vsel %vm217, %v202, 0
        %v249 = vsel %vm217, %v203, 0
        %v252 = vsel %vm217, %v204, 0
        %v255 = vsel %vm217, %v205, 0
        %v258 = vsel %vm217, %v206, 0
        %v261 = vsel %vm217, %v207, 0
        %v264 = vsel %vm217, %v208, 0
        %v267 = vsel %vm217, %v209, 0
        %v270 = vsel %vm217, %v210, 0
        %v273 = vsel %vm217, %v211, 0
        %v276 = vsel %vm217, %v212, 0
        %278 = vmatpush.xpose.msra.mxu0 %v276
        %279 = vmatpush.xpose.msra.mxu0 %v273
        %280 = vmatpush.xpose.msra.mxu0 %v270
        %281 = vmatpush.xpose.msra.mxu0 %v267
        %282 = vmatpush.xpose.msra.mxu0 %v264
        %283 = vmatpush.xpose.msra.mxu0 %v261
        %284 = vmatpush.xpose.msra.mxu0 %v258
        %285 = vmatpush.xpose.msra.mxu0 %v255
        %286 = vmatpush.xpose.msra.mxu0 %v252
        %287 = vmatpush.xpose.msra.mxu0 %v249
        %288 = vmatpush.xpose.msra.mxu0 %v246
        %289 = vmatpush.xpose.msra.mxu0 %v243
        %290 = vmatpush.xpose.msra.mxu0 %v240
        %291 = vmatpush.xpose.msra.mxu0 %v237
        %292 = vmatpush.xpose.msra.mxu0 %v234
        %293 = vmatpush.xpose.msra.mxu0 %v231
        %294 = vmatmul.f32.gmra.mxu0 %v219
        %v295 = vpop.f32.mrf.mxu0
        %v296 = vadd.f32 0.0, %v295
        %297 = vmatmul.f32.gmra.mxu0 %v222
        %v298 = vpop.f32.mrf.mxu0
        %v299 = vadd.f32 0.0, %v298
        %300 = vmatmul.f32.gmra.mxu0 %v225
        %v301 = vpop.f32.mrf.mxu0
        %v302 = vadd.f32 0.0, %v301
        %303 = vmatmul.f32.gmra.mxu0 %v228
        %v304 = vpop.f32.mrf.mxu0
        %v305 = vadd.f32 0.0, %v304
        %306 = vdwg.mxu0
        %s308 = sor.u32 256, 120
        %309 = vrot.lane.b32.xlu0 %v296, %s308
        %v310 = vpop.permute.xlu0 %309
        %vm311 = vcmask 64512
        %312 = vst.msk [vmem:[%s178] sm:$0xff] %vm311, %v310
        %s314 = sor.u32 256, 120
        %315 = vrot.lane.b32.xlu0 %v299, %s314
        %v316 = vpop.permute.xlu0 %315
        %s317 = scalar_lea.vmem %s178, 8 [#allocation2]
        %318 = vst.msk [vmem:[%s317] sm:$0xff] %vm311, %v316
        %s320 = sor.u32 256, 120
        %321 = vrot.lane.b32.xlu0 %v302, %s320
        %v322 = vpop.permute.xlu0 %321
        %s323 = scalar_lea.vmem %s178, 16 [#allocation2]
        %324 = vst.msk [vmem:[%s323] sm:$0xff] %vm311, %v322
        %s326 = sor.u32 256, 120
        %327 = vrot.lane.b32.xlu0 %v305, %s326
        %v328 = vpop.permute.xlu0 %327
        %s329 = scalar_lea.vmem %s178, 24 [#allocation2]
        %330 = vst.msk [vmem:[%s329] sm:$0xff] %vm311, %v328
        %s331 = sand.u32 %s98, 1
        %s332 = scalar_lea.sflag [#allocation3], %s331
        %s333 = sand.u32 %s98, 1
        %s334 = smul.addr %s333, 32
        %s335 = scalar_lea.vmem [#allocation2], %s334
        // Predicated region
        $region29: #{tpu_custom_call.1} parent=27 // pred_check
          %p336 = pneg %p108
        $region30: #{tpu_custom_call.1} parent=27 // pred_check_branch
          %338 = sbr.rel (%p336) target = $region32
        $region31: #{tpu_custom_call.1} parent=27 // pred_region
          %s339 = smul.u32 4, %s22
          %341 = vsyncadd %s332, 0
          %s342 = sadd.s32 %s23, %s339
          %s343 = smul.addr %s21, 4
          %s344 = sadd.s32 %s342, %s343
          %s345 = smul.addr %s344, 8
          %s346 = scalar_lea.hbm %s2, %s345
          %s347 = sshll.u32 %s335, 4
          %s348 = int_to_ptr.vmem [resolvable:$true] %s347
          %s349 = sshll.u32 %s346, 4
          %s350 = int_to_ptr.hbm [resolvable:$true] %s349
          %355 = dma.vmem_to_hbm [thread:$0]  %s348, 512, %s350, %s332, 128, 128, 8
        $region32: #{tpu_custom_call.1} parent=27 // pred_fallthru
          _
      $region28: #{tpu_custom_call.1} parent=5 // pred_fallthru
        _
      %p356 = scmp.le.s32.totalorder 2, %s11
      // Predicated region
      $region33: #{tpu_custom_call.1} parent=5 // pred_check
        %p357 = pneg %p356
      $region34: #{tpu_custom_call.1} parent=5 // pred_check_branch
        %359 = sbr.rel (%p357) target = $region36
      $region35: #{tpu_custom_call.1} parent=5 // pred_region
        %s360 = ssub.s32 %s11, 2
        // Predicated region
        $region37: #{tpu_custom_call.1} parent=35 // pred_check
          %p361 = pneg %p114
        $region38: #{tpu_custom_call.1} parent=35 // pred_check_branch
          %363 = sbr.rel (%p361) target = $region40
        $region39: #{tpu_custom_call.1} parent=35 // pred_region
          %s364 = sand.u32 %s99, 1
          %s365 = scalar_lea.sflag [#allocation3], %s364
          %s366 = sand.u32 %s99, 1
          %s367 = smul.addr %s366, 32
          %s368 = scalar_lea.vmem [#allocation2], %s367
          %370 = dma.done %s365, 512
        $region40: #{tpu_custom_call.1} parent=35 // pred_fallthru
          _
      $region36: #{tpu_custom_call.1} parent=5 // pred_fallthru
        _
    $region6: #{tpu_custom_call.1} parent=1 // loop_footer
      %s15 = sadd.s32 1, %s11
    $region7: #{tpu_custom_call.1} parent=1 // loop_footer_branch
      %10 = sbr.rel target = $region3
    $region8: #{tpu_custom_call.1} parent=1 // loop_exit
      _
    %371 = vsyncpa [#allocation3], 1
    %s372 = scalar_lea.sflag [#allocation3], 1
    %373 = vsyncpa %s372, 1

</llo_original>
